<compile_context>
chip_gen: v5e
topology: v5e:2x2
jax: 0.10.0
libtpu: 0.0.40
codegen_flags: <defaults>
</compile_context>

<pallas_src>
import functools

import jax
import jax.numpy as jnp
import numpy as np
from jax.experimental import pallas as pl
from jax.experimental.pallas import tpu as pltpu


def _mlp_kernel(*refs, num_layers):
    """refs = (x_ref, w0_ref, b0_ref, w1_ref, b1_ref, ..., o_ref)."""
    x_ref = refs[0]
    o_ref = refs[-1]

    h = x_ref[...]                                      # (tb, in_features) bf16
    for l in range(num_layers):                         # static unroll, L is small
        w = refs[1 + 2 * l][...]                        # (m_l, n_l) bf16, pre-transposed
        b = refs[2 + 2 * l][...]                        # (1, n_l)   f32
        acc = jnp.dot(h, w, preferred_element_type=jnp.float32)   # MXU, f32 acc
        acc = jnp.maximum(acc + b, 0.0)                 # bias + ReLU in f32 (VPU)
        if l + 1 < num_layers:
            h = acc.astype(jnp.bfloat16)                # bf16 operand for next matmul
        else:
            h = acc                                     # final layer stays f32
    o_ref[...] = h.astype(o_ref.dtype)


def prepare_dense_arch_params(weights, biases):
    """Hoisted out of the forward path (do this once at init).

    weights: list of L arrays in PyTorch layout (out_l, in_l)
    biases:  list of L arrays, shape (out_l,)
    Returns (wts, brows): weights transposed to (in_l, out_l) and cast to bf16,
    biases reshaped to (1, out_l) f32 rows.
    """
    wts = [jnp.asarray(W, jnp.float32).T.astype(jnp.bfloat16) for W in weights]
    brows = [jnp.asarray(b, jnp.float32).reshape(1, -1) for b in biases]
    return wts, brows


def _round_up(x, m):
    return ((x + m - 1) // m) * m


def _pick_batch_tile(B):
    # Prefer large tiles (amortize the ~0.35 us/step pipeline overhead and the
    # MXU fill), but keep >= 4 grid steps for moderate batches so both v7x
    # TensorCores get >= 2 steps each to overlap DMA with compute.
    if B >= 4096:
        return 512
    if B >= 1024:
        return 256
    if B >= 256:
        return 128
    return _round_up(B, 8)          # small batch: one (padded) tile


def dense_arch_forward(x, wts, brows, *, batch_tile=None):
    """DenseArch forward.

    x:     (B, in_features) f32 (or bf16)
    wts:   list of L pre-transposed bf16 weights, shape (in_l, out_l)
    brows: list of L f32 bias rows, shape (1, out_l)
    """
    B, in_features = x.shape
    L = len(wts)
    assert L == len(brows) and L >= 1

    # Per-layer (in, out) dims, validated against the chain.
    dims = []
    d = in_features
    for w in wts:
        m, n = w.shape
        assert m == d, f"layer expects in={d}, got transposed weight {w.shape}"
        dims.append((m, n))
        d = n
    out_features = d

    # --- batch tiling: fixed preferred tile + padded (cdiv) grid. ---
    if batch_tile is None:
        batch_tile = _pick_batch_tile(B)
    batch_tile = _round_up(batch_tile, 8)
    n_blocks = pl.cdiv(B, batch_tile)
    B_pad = n_blocks * batch_tile

    x_bf = x.astype(jnp.bfloat16)
    if B_pad != B:
        x_bf = jnp.pad(x_bf, ((0, B_pad - B), (0, 0)))

    flat_inputs = [x_bf]
    in_specs = [pl.BlockSpec((batch_tile, in_features), lambda i: (i, 0))]
    for (m, n), wt, br in zip(dims, wts, brows):
        flat_inputs += [wt, br]
        # Constant block index => params DMA'd once, VMEM-resident across grid.
        in_specs += [pl.BlockSpec((m, n), lambda i: (0, 0)),
                     pl.BlockSpec((1, n), lambda i: (0, 0))]

    # --- scoped-VMEM budget (explicit: v5e defaults to only 16 MiB). ---
    vmem_bytes = 2 * batch_tile * in_features * 2          # x tiles, bf16, 2 bufs
    vmem_bytes += 2 * batch_tile * out_features * 4        # out tiles, f32, 2 bufs
    for m, n in dims:
        vmem_bytes += 2 * (m * n * 2 + n * 4)              # resident params, 2 bufs
        vmem_bytes += batch_tile * n * 4                   # live f32 activation
    vmem_limit = int(min(64 * 2**20, max(32 * 2**20, 2 * vmem_bytes)))

    # --- cost hint so XLA can schedule embedding/interaction work around us. ---
    flops = sum(2 * B_pad * m * n + 2 * B_pad * n for m, n in dims)
    bytes_accessed = (B_pad * in_features * 2 + B_pad * out_features * 4
                      + sum(m * n * 2 + n * 4 for m, n in dims))
    cost = pl.CostEstimate(flops=int(flops), transcendentals=0,
                           bytes_accessed=int(bytes_accessed))

    kernel = functools.partial(_mlp_kernel, num_layers=L)

    out = pl.pallas_call(
        kernel,
        out_shape=jax.ShapeDtypeStruct((B_pad, out_features), jnp.float32),
        grid_spec=pltpu.PrefetchScalarGridSpec(
            num_scalar_prefetch=0,
            grid=(n_blocks,),
            in_specs=in_specs,
            out_specs=pl.BlockSpec((batch_tile, out_features), lambda i: (i, 0)),
        ),
        compiler_params=pltpu.CompilerParams(
            dimension_semantics=("parallel",),
            vmem_limit_bytes=vmem_limit),
        cost_estimate=cost,
    )(*flat_inputs)

    return out[:B]


def _reference(x, weights, biases):
    h = x
    for W, b in zip(weights, biases):
        h = jnp.maximum(h @ W.T + b, 0.0)
    return h


if __name__ == "__main__":
    # Shapes consistent with a DLRM dense arch (lane-aligned feature dims).
    in_features = 128
    layer_sizes = [256, 128]
    L = len(layer_sizes)

    key = jax.random.PRNGKey(0)
    keys = jax.random.split(key, 2 + 2 * L)
    kx1, kx2, kws = keys[0], keys[1], keys[2:]

    weights, biases = [], []
    m = in_features
    for i, n in enumerate(layer_sizes):
        # kaiming_uniform_((n, m), a=sqrt(5)) -> bound = 1/sqrt(fan_in)
        bound = 1.0 / np.sqrt(m)
        W = jax.random.uniform(kws[2 * i], (n, m), dtype=jnp.float32,
                               minval=-bound, maxval=bound)
        # PyTorch init uses zero bias; use small nonzero bias so the bias-add
        # path is actually exercised by the check.
        b = 0.01 * jax.random.normal(kws[2 * i + 1], (n,), dtype=jnp.float32)
        weights.append(W)
        biases.append(b)
        m = n

    # Parameter prep hoisted out of the per-call path.
    wts, brows = prepare_dense_arch_params(weights, biases)
    fwd = jax.jit(dense_arch_forward)

    # Case 1: B=512 -> 128-row tiles, 4-step parallel grid (2 steps per v7x TC).
    # Case 2: B=203 -> exercises the padded (cdiv) last block.
    for kx, batch in ((kx1, 512), (kx2, 203)):
        x = jax.random.normal(kx, (batch, in_features), dtype=jnp.float32)
        out = jax.block_until_ready(fwd(x, wts, brows))
        ref = _reference(x, weights, biases)
        # bf16 matmul operands with f32 accumulation -> loosened tolerance.
        np.testing.assert_allclose(np.asarray(out), np.asarray(ref),
                                   rtol=2e-2, atol=2e-2)

    print("KERNEL_OK")
</pallas_src>

<mosaic_0001>
module attributes {stable_mosaic.version = 11 : i64} {
  func.func @_mlp_kernel(%arg0: i32, %arg1: memref<128x128xbf16, #tpu.memory_space<vmem>>, %arg2: memref<128x256xbf16, #tpu.memory_space<vmem>>, %arg3: memref<1x256xf32, #tpu.memory_space<vmem>>, %arg4: memref<256x128xbf16, #tpu.memory_space<vmem>>, %arg5: memref<1x128xf32, #tpu.memory_space<vmem>>, %arg6: memref<128x128xf32, #tpu.memory_space<vmem>>) attributes {dimension_semantics = [#tpu.dimension_semantics<parallel>], iteration_bounds = array<i64: 4>, scalar_prefetch = 0 : i64, scratch_operands = 0 : i64, tpu.core_type = #tpu.core_type<tc>, window_params = [{transform_indices = @transform_0, window_bounds = array<i64: 128, 128>}, {pipeline_mode = #tpu.pipeline_mode<synchronous>, transform_indices = @transform_1, window_bounds = array<i64: 128, 256>}, {pipeline_mode = #tpu.pipeline_mode<synchronous>, transform_indices = @transform_2, window_bounds = array<i64: 1, 256>}, {pipeline_mode = #tpu.pipeline_mode<synchronous>, transform_indices = @transform_3, window_bounds = array<i64: 256, 128>}, {pipeline_mode = #tpu.pipeline_mode<synchronous>, transform_indices = @transform_4, window_bounds = array<i64: 1, 128>}, {transform_indices = @transform_5, window_bounds = array<i64: 128, 128>}]} {
    %c0 = arith.constant 0 : index
    %c0_0 = arith.constant 0 : index
    %0 = vector.load %arg1[%c0, %c0_0] : memref<128x128xbf16, #tpu.memory_space<vmem>>, vector<128x128xbf16>
    %c0_1 = arith.constant 0 : index
    %c0_2 = arith.constant 0 : index
    %1 = vector.load %arg2[%c0_1, %c0_2] : memref<128x256xbf16, #tpu.memory_space<vmem>>, vector<128x256xbf16>
    %c0_3 = arith.constant 0 : index
    %c0_4 = arith.constant 0 : index
    %2 = vector.load %arg3[%c0_3, %c0_4] : memref<1x256xf32, #tpu.memory_space<vmem>>, vector<1x256xf32>
    %cst = arith.constant dense<0.000000e+00> : vector<128x256xf32>
    %3 = tpu.matmul %0, %1, %cst {dimension_numbers = #tpu.dot_dimension_numbers<[1], [0], [0], [1], [0, 0, 1, 1], [], []>} : vector<128x128xbf16>, vector<128x256xbf16>, vector<128x256xf32> -> vector<128x256xf32>
    %4 = vector.broadcast %2 : vector<1x256xf32> to vector<128x256xf32>
    %5 = arith.addf %3, %4 : vector<128x256xf32>
    %cst_5 = arith.constant 0.000000e+00 : f32
    %6 = vector.broadcast %cst_5 : f32 to vector<128x256xf32>
    %7 = arith.maximumf %5, %6 : vector<128x256xf32>
    %8 = arith.truncf %7 : vector<128x256xf32> to vector<128x256xbf16>
    %c0_6 = arith.constant 0 : index
    %c0_7 = arith.constant 0 : index
    %9 = vector.load %arg4[%c0_6, %c0_7] : memref<256x128xbf16, #tpu.memory_space<vmem>>, vector<256x128xbf16>
    %c0_8 = arith.constant 0 : index
    %c0_9 = arith.constant 0 : index
    %10 = vector.load %arg5[%c0_8, %c0_9] : memref<1x128xf32, #tpu.memory_space<vmem>>, vector<1x128xf32>
    %cst_10 = arith.constant dense<0.000000e+00> : vector<128x128xf32>
    %11 = tpu.matmul %8, %9, %cst_10 {dimension_numbers = #tpu.dot_dimension_numbers<[1], [0], [0], [1], [0, 0, 1, 1], [], []>} : vector<128x256xbf16>, vector<256x128xbf16>, vector<128x128xf32> -> vector<128x128xf32>
    %12 = vector.broadcast %10 : vector<1x128xf32> to vector<128x128xf32>
    %13 = arith.addf %11, %12 : vector<128x128xf32>
    %cst_11 = arith.constant 0.000000e+00 : f32
    %14 = vector.broadcast %cst_11 : f32 to vector<128x128xf32>
    %15 = arith.maximumf %13, %14 : vector<128x128xf32>
    %c0_12 = arith.constant 0 : index
    %c0_13 = arith.constant 0 : index
    %16 = vector.load %arg6[%c0_12, %c0_13] : memref<128x128xf32, #tpu.memory_space<vmem>>, vector<128x128xf32>
    tpu.vector_store %arg6[%c0_12, %c0_13], %15 {strides = array<i32>} : memref<128x128xf32, #tpu.memory_space<vmem>>, vector<128x128xf32>,
    return
  }
  func.func @transform_0(%arg0: i32) -> (i32, i32) {
    %c0_i32 = arith.constant 0 : i32
    %c0_i32_0 = arith.constant 0 : i32
    return %arg0, %c0_i32 : i32, i32
  }
  func.func @transform_1(%arg0: i32) -> (i32, i32) {
    %c0_i32 = arith.constant 0 : i32
    %c0_i32_0 = arith.constant 0 : i32
    %c0_i32_1 = arith.constant 0 : i32
    return %c0_i32, %c0_i32_0 : i32, i32
  }
  func.func @transform_2(%arg0: i32) -> (i32, i32) {
    %c0_i32 = arith.constant 0 : i32
    %c0_i32_0 = arith.constant 0 : i32
    %c0_i32_1 = arith.constant 0 : i32
    return %c0_i32, %c0_i32_0 : i32, i32
  }
  func.func @transform_3(%arg0: i32) -> (i32, i32) {
    %c0_i32 = arith.constant 0 : i32
    %c0_i32_0 = arith.constant 0 : i32
    %c0_i32_1 = arith.constant 0 : i32
    return %c0_i32, %c0_i32_0 : i32, i32
  }
  func.func @transform_4(%arg0: i32) -> (i32, i32) {
    %c0_i32 = arith.constant 0 : i32
    %c0_i32_0 = arith.constant 0 : i32
    %c0_i32_1 = arith.constant 0 : i32
    return %c0_i32, %c0_i32_0 : i32, i32
  }
  func.func @transform_5(%arg0: i32) -> (i32, i32) {
    %c0_i32 = arith.constant 0 : i32
    %c0_i32_0 = arith.constant 0 : i32
    return %arg0, %c0_i32 : i32, i32
  }
}

</mosaic_0001>

<llo_original>
// kernel: dense_arch_forward.1
$region0: #{dense_arch_forward.1}
  #allocation0 [shape = 'u32[]', space=smem, size = 0x4, offset = 0x4, fixed_abs, tag = 'smem constant byte address 0x4 - core index']
  #allocation1 [shape = 'u32[72,128]{1,0:T(1,128)}', space=vmem, size = 0x9000, scoped, tag = 'internal scratch']
  %s0 = inlined_call_operand.vmem [shape: bf16[512,128], index: 0, kind: input, shape index: {}]
  %s1 = inlined_call_operand.vmem [shape: bf16[128,256], index: 1, kind: input, shape index: {}]
  %s2 = inlined_call_operand.vmem [shape: f32[1,256], index: 2, kind: input, shape index: {}]
  %s3 = inlined_call_operand.vmem [shape: bf16[256,128], index: 3, kind: input, shape index: {}]
  %s4 = inlined_call_operand.vmem [shape: f32[1,128], index: 4, kind: input, shape index: {}]
  %s5 = inlined_call_operand.hbm [shape: f32[512,128], index: 5, kind: output, shape index: {}]
  %s6 = sld [smem:[#allocation0]]
  $region53: #{dense_arch_forward.1} parent=0
    _
  %s8 = ssub.s32 1, %s6
  %s9 = scalar_select 0, %s8, %s6
  $region1: #{dense_arch_forward.1} parent=0
    #allocation2 [shape = 'u8[131072]{0}', space=vmem, size = 0x20000, scoped, tag = 'output window, operand 0']
    #allocation3 [shape = 's32[2]{0}', space=sflag, size = 0x8, scoped, tag = 'scoped memory for dense_arch_forward.1']
    %10 = vsyncpa [#allocation3], 0
    %s11 = scalar_lea.sflag [#allocation3], 1
    %12 = vsyncpa %s11, 0
    loop: start=0, step=1, limit=6
    $region2: #{dense_arch_forward.1} parent=1 // loop_pre_header
      _
    $region3: #{dense_arch_forward.1} parent=1 // loop_header
      %s14 = sphi 0, %s18
      %p15 = scmp.ge.s32.totalorder %s14, 6
      %s24 = sphi 0, %s26
      %s27 = sphi 0, %s24
      %s28 = sphi 0, %s27
      %s44 = sphi 0, %s28
      %s48 = sphi 0, %s48
      %s50 = sphi 0, %s48
      %s51 = sphi 0, %s50
      %s65 = sphi 0, %s51
      %s69 = sphi 0, %s69
      %s71 = sphi 0, %s69
      %s72 = sphi 0, %s71
      %s86 = sphi 0, %s72
      %s90 = sphi 0, %s90
      %s92 = sphi 0, %s90
      %s93 = sphi 0, %s92
      %s107 = sphi 0, %s93
      %s111 = sphi 0, %s111
      %s113 = sphi 0, %s111
      %s114 = sphi 0, %s113
      %s128 = sphi 0, %s114
      %s134 = sphi 0, %s136
      %s137 = sphi 0, %s134
      %s138 = sphi 0, %s137
      %s154 = sphi 0, %s138
    $region4: #{dense_arch_forward.1} parent=1 // loop_header_branch
      %17 = sbr.rel (%p15) target = $region8
    $region5: #{dense_arch_forward.1} parent=1 // loop_body
      %s19 = ssub.s32 %s14, 1
      %s20 = ssub.s32 %s14, 2
      %s21 = sadd.s32 %s14, 1
      %s22 = ssub.s32 %s14, %s21
      %p23 = scmp.eq.s32.totalorder %s22, 0
      %s25 = sadd.s32 %s24, 1
      %s26 = scalar_select %p23, %s24, %s25
      %p29 = pneg %p23
      %p30 = scmp.eq.s32.totalorder %s14, 3
      %p31 = por %p29, %p30
      %p32 = scmp.ne.s32.totalorder %s24, %s27
      %p33 = scmp.eq.s32.totalorder %s14, 0
      %p34 = por %p32, %p33
      %p35 = scmp.ne.s32.totalorder %s24, %s27
      %p36 = scmp.eq.s32.totalorder %s19, 3
      %p37 = por %p35, %p36
      %p38 = scmp.ne.s32.totalorder %s27, %s28
      %p39 = scmp.eq.s32.totalorder %s19, 0
      %p40 = por %p38, %p39
      %p41 = scmp.ne.s32.totalorder %s27, %s28
      %p42 = scmp.eq.s32.totalorder %s20, 3
      %p43 = por %p41, %p42
      %p45 = scmp.ne.s32.totalorder %s28, %s44
      %p46 = scmp.eq.s32.totalorder %s20, 0
      %p47 = por %p45, %p46
      %s49 = sadd.s32 %s48, 1
      %p52 = scmp.eq.s32.totalorder %s14, 3
      %p53 = scmp.ne.s32.totalorder %s48, %s50
      %p54 = scmp.eq.s32.totalorder %s14, 0
      %p55 = por %p53, %p54
      %p56 = scmp.ne.s32.totalorder %s48, %s50
      %p57 = scmp.eq.s32.totalorder %s19, 3
      %p58 = por %p56, %p57
      %p59 = scmp.ne.s32.totalorder %s50, %s51
      %p60 = scmp.eq.s32.totalorder %s19, 0
      %p61 = por %p59, %p60
      %p62 = scmp.ne.s32.totalorder %s50, %s51
      %p63 = scmp.eq.s32.totalorder %s20, 3
      %p64 = por %p62, %p63
      %p66 = scmp.ne.s32.totalorder %s51, %s65
      %p67 = scmp.eq.s32.totalorder %s20, 0
      %p68 = por %p66, %p67
      %s70 = sadd.s32 %s69, 1
      %p73 = scmp.eq.s32.totalorder %s14, 3
      %p74 = scmp.ne.s32.totalorder %s69, %s71
      %p75 = scmp.eq.s32.totalorder %s14, 0
      %p76 = por %p74, %p75
      %p77 = scmp.ne.s32.totalorder %s69, %s71
      %p78 = scmp.eq.s32.totalorder %s19, 3
      %p79 = por %p77, %p78
      %p80 = scmp.ne.s32.totalorder %s71, %s72
      %p81 = scmp.eq.s32.totalorder %s19, 0
      %p82 = por %p80, %p81
      %p83 = scmp.ne.s32.totalorder %s71, %s72
      %p84 = scmp.eq.s32.totalorder %s20, 3
      %p85 = por %p83, %p84
      %p87 = scmp.ne.s32.totalorder %s72, %s86
      %p88 = scmp.eq.s32.totalorder %s20, 0
      %p89 = por %p87, %p88
      %s91 = sadd.s32 %s90, 1
      %p94 = scmp.eq.s32.totalorder %s14, 3
      %p95 = scmp.ne.s32.totalorder %s90, %s92
      %p96 = scmp.eq.s32.totalorder %s14, 0
      %p97 = por %p95, %p96
      %p98 = scmp.ne.s32.totalorder %s90, %s92
      %p99 = scmp.eq.s32.totalorder %s19, 3
      %p100 = por %p98, %p99
      %p101 = scmp.ne.s32.totalorder %s92, %s93
      %p102 = scmp.eq.s32.totalorder %s19, 0
      %p103 = por %p101, %p102
      %p104 = scmp.ne.s32.totalorder %s92, %s93
      %p105 = scmp.eq.s32.totalorder %s20, 3
      %p106 = por %p104, %p105
      %p108 = scmp.ne.s32.totalorder %s93, %s107
      %p109 = scmp.eq.s32.totalorder %s20, 0
      %p110 = por %p108, %p109
      %s112 = sadd.s32 %s111, 1
      %p115 = scmp.eq.s32.totalorder %s14, 3
      %p116 = scmp.ne.s32.totalorder %s111, %s113
      %p117 = scmp.eq.s32.totalorder %s14, 0
      %p118 = por %p116, %p117
      %p119 = scmp.ne.s32.totalorder %s111, %s113
      %p120 = scmp.eq.s32.totalorder %s19, 3
      %p121 = por %p119, %p120
      %p122 = scmp.ne.s32.totalorder %s113, %s114
      %p123 = scmp.eq.s32.totalorder %s19, 0
      %p124 = por %p122, %p123
      %p125 = scmp.ne.s32.totalorder %s113, %s114
      %p126 = scmp.eq.s32.totalorder %s20, 3
      %p127 = por %p125, %p126
      %p129 = scmp.ne.s32.totalorder %s114, %s128
      %p130 = scmp.eq.s32.totalorder %s20, 0
      %p131 = por %p129, %p130
      %s132 = ssub.s32 %s14, %s21
      %p133 = scmp.eq.s32.totalorder %s132, 0
      %s135 = sadd.s32 %s134, 1
      %s136 = scalar_select %p133, %s134, %s135
      %p139 = pneg %p133
      %p140 = scmp.eq.s32.totalorder %s14, 3
      %p141 = por %p139, %p140
      %p142 = scmp.ne.s32.totalorder %s134, %s137
      %p143 = scmp.eq.s32.totalorder %s14, 0
      %p144 = por %p142, %p143
      %p145 = scmp.ne.s32.totalorder %s134, %s137
      %p146 = scmp.eq.s32.totalorder %s19, 3
      %p147 = por %p145, %p146
      %p148 = scmp.ne.s32.totalorder %s137, %s138
      %p149 = scmp.eq.s32.totalorder %s19, 0
      %p150 = por %p148, %p149
      %p151 = scmp.ne.s32.totalorder %s137, %s138
      %p152 = scmp.eq.s32.totalorder %s20, 3
      %p153 = por %p151, %p152
      %p155 = scmp.ne.s32.totalorder %s138, %s154
      %p156 = scmp.eq.s32.totalorder %s20, 0
      %p157 = por %p155, %p156
      %p158 = scmp.le.s32.totalorder 1, %s14
      %p159 = scmp.lt.s32.totalorder %s14, 5
      %p160 = pnand %p158, %p159
      %p161 = pneg %p160
      // Predicated region
      $region9: #{dense_arch_forward.1} parent=5 // pred_check
        _
      $region10: #{dense_arch_forward.1} parent=5 // pred_check_branch
        %163 = sbr.rel (%p160) target = $region12
      $region11: #{dense_arch_forward.1} parent=5 // pred_region
        %s164 = ssub.s32 %s14, 1
        // Predicated region
        $region13: #{dense_arch_forward.1} parent=11 // pred_check
          %p165 = pneg %p61
        $region14: #{dense_arch_forward.1} parent=11 // pred_check_branch
          %167 = sbr.rel (%p165) target = $region16
        $region15: #{dense_arch_forward.1} parent=11 // pred_region
          _
        $region16: #{dense_arch_forward.1} parent=11 // pred_fallthru
          _
        // Predicated region
        $region17: #{dense_arch_forward.1} parent=11 // pred_check
          %p168 = pneg %p82
        $region18: #{dense_arch_forward.1} parent=11 // pred_check_branch
          %170 = sbr.rel (%p168) target = $region20
        $region19: #{dense_arch_forward.1} parent=11 // pred_region
          _
        $region20: #{dense_arch_forward.1} parent=11 // pred_fallthru
          _
        // Predicated region
        $region21: #{dense_arch_forward.1} parent=11 // pred_check
          %p171 = pneg %p103
        $region22: #{dense_arch_forward.1} parent=11 // pred_check_branch
          %173 = sbr.rel (%p171) target = $region24
        $region23: #{dense_arch_forward.1} parent=11 // pred_region
          _
        $region24: #{dense_arch_forward.1} parent=11 // pred_fallthru
          _
        // Predicated region
        $region25: #{dense_arch_forward.1} parent=11 // pred_check
          %p174 = pneg %p124
        $region26: #{dense_arch_forward.1} parent=11 // pred_check_branch
          %176 = sbr.rel (%p174) target = $region28
        $region27: #{dense_arch_forward.1} parent=11 // pred_region
          _
        $region28: #{dense_arch_forward.1} parent=11 // pred_fallthru
          _
      $region12: #{dense_arch_forward.1} parent=5 // pred_fallthru
        _
      %p177 = scmp.lt.s32.totalorder %s14, 4
      // Predicated region
      $region29: #{dense_arch_forward.1} parent=5 // pred_check
        %p178 = pneg %p177
      $region30: #{dense_arch_forward.1} parent=5 // pred_check_branch
        %180 = sbr.rel (%p178) target = $region32
      $region31: #{dense_arch_forward.1} parent=5 // pred_region
        // Predicated region
        $region33: #{dense_arch_forward.1} parent=31 // pred_check
          %p181 = pneg %p34
        $region34: #{dense_arch_forward.1} parent=31 // pred_check_branch
          %183 = sbr.rel (%p181) target = $region36
        $region35: #{dense_arch_forward.1} parent=31 // pred_region
          %s184 = smul.u32 16, %s14
          %p185 = scmp.lt.s32.totalorder %s184, 63
          %s186 = scalar_select %p185, %s184, 63
          %s187 = smul.addr %s186, 4
          %s188 = scalar_lea.vmem %s0, %s187
          %s189 = smul.u32 16, %s14
        $region36: #{dense_arch_forward.1} parent=31 // pred_fallthru
          _
      $region32: #{dense_arch_forward.1} parent=5 // pred_fallthru
        _
      %p190 = scmp.le.s32.totalorder 1, %s14
      %p191 = scmp.lt.s32.totalorder %s14, 5
      %p192 = pnand %p190, %p191
      %p193 = pneg %p192
      // Predicated region
      $region37: #{dense_arch_forward.1} parent=5 // pred_check
        _
      $region38: #{dense_arch_forward.1} parent=5 // pred_check_branch
        %195 = sbr.rel (%p192) target = $region40
      $region39: #{dense_arch_forward.1} parent=5 // pred_region
        %s196 = ssub.s32 %s14, 1
        %s197 = smul.u32 16, %s19
        %p198 = scmp.lt.s32.totalorder %s197, 63
        %s199 = scalar_select %p198, %s197, 63
        %s200 = smul.addr %s199, 4
        %s201 = scalar_lea.vmem %s0, %s200
        %p202 = pneg %p40
        %p203 = pneg %p37
        %p204 = pneg %p61
        %p205 = pneg %p58
        %p206 = pneg %p82
        %p207 = pneg %p79
        %p208 = pneg %p103
        %p209 = pneg %p100
        %p210 = pneg %p124
        %p211 = pneg %p121
        %p212 = pneg %p150
        %p213 = pneg %p147
        %s214 = sand.u32 %s137, 1
        %s215 = scalar_lea.sflag [#allocation3], %s214
        %s216 = sand.u32 %s137, 1
        %s217 = smul.addr %s216, 128
        %s218 = scalar_lea.vmem [#allocation2], %s217
        %s219 = smul.u32 16, %s19
        %p220 = scmp.lt.s32.totalorder %s219, 63
        %s221 = scalar_select %p220, %s219, 63
        %s222 = smul.addr %s221, 4
        %s223 = scalar_lea.vmem %s0, %s222
        %s224 = smul.u32 16, %s19
        %s225 = smul.u32 16, %s19
        %v226 = vld [vmem:[%s223] sm:$0xf]
        %v227 = vld [vmem:[%s223 + $0x4] sm:$0xf]
        %v228 = vld [vmem:[%s223 + $0x8] sm:$0xf]
        %v229 = vld [vmem:[%s223 + $0xc] sm:$0xf]
        %v230 = vld [vmem:[%s223 + $0x10] sm:$0xf]
        %v231 = vld [vmem:[%s223 + $0x14] sm:$0xf]
        %v232 = vld [vmem:[%s223 + $0x18] sm:$0xf]
        %v233 = vld [vmem:[%s223 + $0x1c] sm:$0xf]
        %v234 = vld [vmem:[%s223 + $0x20] sm:$0xf]
        %v235 = vld [vmem:[%s223 + $0x24] sm:$0xf]
        %v236 = vld [vmem:[%s223 + $0x28] sm:$0xf]
        %v237 = vld [vmem:[%s223 + $0x2c] sm:$0xf]
        %v238 = vld [vmem:[%s223 + $0x30] sm:$0xf]
        %v239 = vld [vmem:[%s223 + $0x34] sm:$0xf]
        %v240 = vld [vmem:[%s223 + $0x38] sm:$0xf]
        %v241 = vld [vmem:[%s223 + $0x3c] sm:$0xf]
        %v242 = vld [vmem:[%s1] sm:$0xff]
        %v243 = vld [vmem:[%s1 + $0x8] sm:$0xff]
        %v244 = vld [vmem:[%s1 + $0x10] sm:$0xff]
        %v245 = vld [vmem:[%s1 + $0x18] sm:$0xff]
        %v246 = vld [vmem:[%s1 + $0x20] sm:$0xff]
        %v247 = vld [vmem:[%s1 + $0x28] sm:$0xff]
        %v248 = vld [vmem:[%s1 + $0x30] sm:$0xff]
        %v249 = vld [vmem:[%s1 + $0x38] sm:$0xff]
        %v250 = vld [vmem:[%s1 + $0x40] sm:$0xff]
        %v251 = vld [vmem:[%s1 + $0x48] sm:$0xff]
        %v252 = vld [vmem:[%s1 + $0x50] sm:$0xff]
        %v253 = vld [vmem:[%s1 + $0x58] sm:$0xff]
        %v254 = vld [vmem:[%s1 + $0x60] sm:$0xff]
        %v255 = vld [vmem:[%s1 + $0x68] sm:$0xff]
        %v256 = vld [vmem:[%s1 + $0x70] sm:$0xff]
        %v257 = vld [vmem:[%s1 + $0x78] sm:$0xff]
        %v258 = vld [vmem:[%s2] sm:$0x3]
        %v260 = vperm.slane %v258, 0
        %v261 = vperm.slane %v258, 1
        %v280 = vunpack.c.l.b16 %v226
        %v281 = vunpack.c.l.b16 %v227
        %v282 = vunpack.c.l.b16 %v228
        %v283 = vunpack.c.l.b16 %v229
        %v284 = vunpack.c.l.b16 %v230
        %v285 = vunpack.c.l.b16 %v231
        %v286 = vunpack.c.l.b16 %v232
        %v287 = vunpack.c.l.b16 %v233
        %v288 = vunpack.c.l.b16 %v234
        %v289 = vunpack.c.l.b16 %v235
        %v290 = vunpack.c.l.b16 %v236
        %v291 = vunpack.c.l.b16 %v237
        %v292 = vunpack.c.l.b16 %v238
        %v293 = vunpack.c.l.b16 %v239
        %v294 = vunpack.c.l.b16 %v240
        %v295 = vunpack.c.l.b16 %v241
        %v296 = vpack.c.b16 %v281, %v280
        %v297 = vpack.c.b16 %v283, %v282
        %v298 = vpack.c.b16 %v285, %v284
        %v299 = vpack.c.b16 %v287, %v286
        %v300 = vpack.c.b16 %v289, %v288
        %v301 = vpack.c.b16 %v291, %v290
        %v302 = vpack.c.b16 %v293, %v292
        %v303 = vpack.c.b16 %v295, %v294
        %v328 = vunpack.c.l.b16 %v242
        %v329 = vunpack.c.h.b16 %v242
        %v330 = vunpack.c.l.b16 %v243
        %v331 = vunpack.c.h.b16 %v243
        %v332 = vunpack.c.l.b16 %v244
        %v333 = vunpack.c.h.b16 %v244
        %v334 = vunpack.c.l.b16 %v245
        %v335 = vunpack.c.h.b16 %v245
        %v336 = vunpack.c.l.b16 %v246
        %v337 = vunpack.c.h.b16 %v246
        %v338 = vunpack.c.l.b16 %v247
        %v339 = vunpack.c.h.b16 %v247
        %v340 = vunpack.c.l.b16 %v248
        %v341 = vunpack.c.h.b16 %v248
        %v342 = vunpack.c.l.b16 %v249
        %v343 = vunpack.c.h.b16 %v249
        %v344 = vunpack.c.l.b16 %v250
        %v345 = vunpack.c.h.b16 %v250
        %v346 = vunpack.c.l.b16 %v251
        %v347 = vunpack.c.h.b16 %v251
        %v348 = vunpack.c.l.b16 %v252
        %v349 = vunpack.c.h.b16 %v252
        %v350 = vunpack.c.l.b16 %v253
        %v351 = vunpack.c.h.b16 %v253
        %v352 = vunpack.c.l.b16 %v254
        %v353 = vunpack.c.h.b16 %v254
        %v354 = vunpack.c.l.b16 %v255
        %v355 = vunpack.c.h.b16 %v255
        %v356 = vunpack.c.l.b16 %v256
        %v357 = vunpack.c.h.b16 %v256
        %v358 = vunpack.c.l.b16 %v257
        %v359 = vunpack.c.h.b16 %v257
        %v360 = vpack.c.b16 %v330, %v328
        %v361 = vpack.c.b16 %v331, %v329
        %v362 = vpack.c.b16 %v334, %v332
        %v363 = vpack.c.b16 %v335, %v333
        %v364 = vpack.c.b16 %v338, %v336
        %v365 = vpack.c.b16 %v339, %v337
        %v366 = vpack.c.b16 %v342, %v340
        %v367 = vpack.c.b16 %v343, %v341
        %v368 = vpack.c.b16 %v346, %v344
        %v369 = vpack.c.b16 %v347, %v345
        %v370 = vpack.c.b16 %v350, %v348
        %v371 = vpack.c.b16 %v351, %v349
        %v372 = vpack.c.b16 %v354, %v352
        %v373 = vpack.c.b16 %v355, %v353
        %v374 = vpack.c.b16 %v358, %v356
        %v375 = vpack.c.b16 %v359, %v357
        %392 = vmatpush.bf16.msra.mxu0 %v374
        %393 = vmatpush.bf16.msra.mxu0 %v372
        %394 = vmatpush.bf16.msra.mxu0 %v370
        %395 = vmatpush.bf16.msra.mxu0 %v368
        %396 = vmatpush.bf16.msra.mxu0 %v366
        %397 = vmatpush.bf16.msra.mxu0 %v364
        %398 = vmatpush.bf16.msra.mxu0 %v362
        %399 = vmatpush.bf16.msra.mxu0 %v360
        %400 = vmatmul.bf16.gmra.mxu0 %v296
        %v401 = vpop.f32.mrf.mxu0
        %v402 = vadd.f32 %v260, %v401
        %v403 = vpop.f32.mrf.mxu0
        %v404 = vadd.f32 %v260, %v403
        %405 = vmatmul.bf16.gmra.mxu0 %v297
        %v406 = vpop.f32.mrf.mxu0
        %v407 = vadd.f32 %v260, %v406
        %v408 = vpop.f32.mrf.mxu0
        %v409 = vadd.f32 %v260, %v408
        %410 = vmatmul.bf16.gmra.mxu0 %v298
        %v411 = vpop.f32.mrf.mxu0
        %v412 = vadd.f32 %v260, %v411
        %v413 = vpop.f32.mrf.mxu0
        %v414 = vadd.f32 %v260, %v413
        %415 = vmatmul.bf16.gmra.mxu0 %v299
        %v416 = vpop.f32.mrf.mxu0
        %v417 = vadd.f32 %v260, %v416
        %v418 = vpop.f32.mrf.mxu0
        %v419 = vadd.f32 %v260, %v418
        %420 = vmatmul.bf16.gmra.mxu0 %v300
        %v421 = vpop.f32.mrf.mxu0
        %v422 = vadd.f32 %v260, %v421
        %v423 = vpop.f32.mrf.mxu0
        %v424 = vadd.f32 %v260, %v423
        %425 = vmatmul.bf16.gmra.mxu0 %v301
        %v426 = vpop.f32.mrf.mxu0
        %v427 = vadd.f32 %v260, %v426
        %v428 = vpop.f32.mrf.mxu0
        %v429 = vadd.f32 %v260, %v428
        %430 = vmatmul.bf16.gmra.mxu0 %v302
        %v431 = vpop.f32.mrf.mxu0
        %v432 = vadd.f32 %v260, %v431
        %v433 = vpop.f32.mrf.mxu0
        %v434 = vadd.f32 %v260, %v433
        %435 = vmatmul.bf16.gmra.mxu0 %v303
        %v436 = vpop.f32.mrf.mxu0
        %v437 = vadd.f32 %v260, %v436
        %v438 = vpop.f32.mrf.mxu0
        %v439 = vadd.f32 %v260, %v438
        %440 = vdwg.mxu0
        %441 = vmatpush.bf16.msra.mxu0 %v375
        %442 = vmatpush.bf16.msra.mxu0 %v373
        %443 = vmatpush.bf16.msra.mxu0 %v371
        %444 = vmatpush.bf16.msra.mxu0 %v369
        %445 = vmatpush.bf16.msra.mxu0 %v367
        %446 = vmatpush.bf16.msra.mxu0 %v365
        %447 = vmatpush.bf16.msra.mxu0 %v363
        %448 = vmatpush.bf16.msra.mxu0 %v361
        %449 = vmatmul.bf16.gmra.mxu0 %v296
        %v450 = vpop.f32.mrf.mxu0
        %v451 = vadd.f32 %v261, %v450
        %v452 = vpop.f32.mrf.mxu0
        %v453 = vadd.f32 %v261, %v452
        %454 = vmatmul.bf16.gmra.mxu0 %v297
        %v455 = vpop.f32.mrf.mxu0
        %v456 = vadd.f32 %v261, %v455
        %v457 = vpop.f32.mrf.mxu0
        %v458 = vadd.f32 %v261, %v457
        %459 = vmatmul.bf16.gmra.mxu0 %v298
        %v460 = vpop.f32.mrf.mxu0
        %v461 = vadd.f32 %v261, %v460
        %v462 = vpop.f32.mrf.mxu0
        %v463 = vadd.f32 %v261, %v462
        %464 = vmatmul.bf16.gmra.mxu0 %v299
        %v465 = vpop.f32.mrf.mxu0
        %v466 = vadd.f32 %v261, %v465
        %v467 = vpop.f32.mrf.mxu0
        %v468 = vadd.f32 %v261, %v467
        %469 = vmatmul.bf16.gmra.mxu0 %v300
        %v470 = vpop.f32.mrf.mxu0
        %v471 = vadd.f32 %v261, %v470
        %v472 = vpop.f32.mrf.mxu0
        %v473 = vadd.f32 %v261, %v472
        %474 = vmatmul.bf16.gmra.mxu0 %v301
        %v475 = vpop.f32.mrf.mxu0
        %v476 = vadd.f32 %v261, %v475
        %v477 = vpop.f32.mrf.mxu0
        %v478 = vadd.f32 %v261, %v477
        %479 = vmatmul.bf16.gmra.mxu0 %v302
        %v480 = vpop.f32.mrf.mxu0
        %v481 = vadd.f32 %v261, %v480
        %v482 = vpop.f32.mrf.mxu0
        %v483 = vadd.f32 %v261, %v482
        %484 = vmatmul.bf16.gmra.mxu0 %v303
        %v485 = vpop.f32.mrf.mxu0
        %v486 = vadd.f32 %v261, %v485
        %v487 = vpop.f32.mrf.mxu0
        %v488 = vadd.f32 %v261, %v487
        %489 = vdwg.mxu0
        %v490 = vmax.f32 %v402, 0.0
        %v491 = vmax.f32 %v451, 0.0
        %v492 = vmax.f32 %v404, 0.0
        %v493 = vmax.f32 %v453, 0.0
        %v494 = vmax.f32 %v407, 0.0
        %v495 = vmax.f32 %v456, 0.0
        %v496 = vmax.f32 %v409, 0.0
        %v497 = vmax.f32 %v458, 0.0
        %v498 = vmax.f32 %v412, 0.0
        %v499 = vmax.f32 %v461, 0.0
        %v500 = vmax.f32 %v414, 0.0
        %v501 = vmax.f32 %v463, 0.0
        %v502 = vmax.f32 %v417, 0.0
        %v503 = vmax.f32 %v466, 0.0
        %v504 = vmax.f32 %v419, 0.0
        %v505 = vmax.f32 %v468, 0.0
        %v506 = vmax.f32 %v422, 0.0
        %v507 = vmax.f32 %v471, 0.0
        %v508 = vmax.f32 %v424, 0.0
        %v509 = vmax.f32 %v473, 0.0
        %v510 = vmax.f32 %v427, 0.0
        %v511 = vmax.f32 %v476, 0.0
        %v512 = vmax.f32 %v429, 0.0
        %v513 = vmax.f32 %v478, 0.0
        %v514 = vmax.f32 %v432, 0.0
        %v515 = vmax.f32 %v481, 0.0
        %v516 = vmax.f32 %v434, 0.0
        %v517 = vmax.f32 %v483, 0.0
        %v518 = vmax.f32 %v437, 0.0
        %v519 = vmax.f32 %v486, 0.0
        %v520 = vmax.f32 %v439, 0.0
        %v521 = vmax.f32 %v488, 0.0
        %v522 = vpack.c.bf16 %v492, %v490
        %v523 = vpack.c.bf16 %v493, %v491
        %v524 = vpack.c.bf16 %v496, %v494
        %v525 = vpack.c.bf16 %v497, %v495
        %v526 = vpack.c.bf16 %v500, %v498
        %v527 = vpack.c.bf16 %v501, %v499
        %v528 = vpack.c.bf16 %v504, %v502
        %v529 = vpack.c.bf16 %v505, %v503
        %v530 = vpack.c.bf16 %v508, %v506
        %v531 = vpack.c.bf16 %v509, %v507
        %v532 = vpack.c.bf16 %v512, %v510
        %v533 = vpack.c.bf16 %v513, %v511
        %v534 = vpack.c.bf16 %v516, %v514
        %v535 = vpack.c.bf16 %v517, %v515
        %v536 = vpack.c.bf16 %v520, %v518
        %v537 = vpack.c.bf16 %v521, %v519
        %v538 = vld [vmem:[%s3] sm:$0xf]
        %v539 = vld [vmem:[%s3 + $0x4] sm:$0xf]
        %v540 = vld [vmem:[%s3 + $0x8] sm:$0xf]
        %v541 = vld [vmem:[%s3 + $0xc] sm:$0xf]
        %v542 = vld [vmem:[%s3 + $0x10] sm:$0xf]
        %v543 = vld [vmem:[%s3 + $0x14] sm:$0xf]
        %v544 = vld [vmem:[%s3 + $0x18] sm:$0xf]
        %v545 = vld [vmem:[%s3 + $0x1c] sm:$0xf]
        %v546 = vld [vmem:[%s3 + $0x20] sm:$0xf]
        %v547 = vld [vmem:[%s3 + $0x24] sm:$0xf]
        %v548 = vld [vmem:[%s3 + $0x28] sm:$0xf]
        %v549 = vld [vmem:[%s3 + $0x2c] sm:$0xf]
        %v550 = vld [vmem:[%s3 + $0x30] sm:$0xf]
        %v551 = vld [vmem:[%s3 + $0x34] sm:$0xf]
        %v552 = vld [vmem:[%s3 + $0x38] sm:$0xf]
        %v553 = vld [vmem:[%s3 + $0x3c] sm:$0xf]
        %v554 = vld [vmem:[%s3 + $0x40] sm:$0xf]
        %v555 = vld [vmem:[%s3 + $0x44] sm:$0xf]
        %v556 = vld [vmem:[%s3 + $0x48] sm:$0xf]
        %v557 = vld [vmem:[%s3 + $0x4c] sm:$0xf]
        %v558 = vld [vmem:[%s3 + $0x50] sm:$0xf]
        %v559 = vld [vmem:[%s3 + $0x54] sm:$0xf]
        %v560 = vld [vmem:[%s3 + $0x58] sm:$0xf]
        %v561 = vld [vmem:[%s3 + $0x5c] sm:$0xf]
        %v562 = vld [vmem:[%s3 + $0x60] sm:$0xf]
        %v563 = vld [vmem:[%s3 + $0x64] sm:$0xf]
        %v564 = vld [vmem:[%s3 + $0x68] sm:$0xf]
        %v565 = vld [vmem:[%s3 + $0x6c] sm:$0xf]
        %v566 = vld [vmem:[%s3 + $0x70] sm:$0xf]
        %v567 = vld [vmem:[%s3 + $0x74] sm:$0xf]
        %v568 = vld [vmem:[%s3 + $0x78] sm:$0xf]
        %v569 = vld [vmem:[%s3 + $0x7c] sm:$0xf]
        %v570 = vld [vmem:[%s4] sm:$0x1]
        %v572 = vperm.slane %v570, 0
        %v606 = vunpack.c.l.b16 %v538
        %v607 = vunpack.c.l.b16 %v539
        %v608 = vunpack.c.l.b16 %v540
        %v609 = vunpack.c.l.b16 %v541
        %v610 = vunpack.c.l.b16 %v542
        %v611 = vunpack.c.l.b16 %v543
        %v612 = vunpack.c.l.b16 %v544
        %v613 = vunpack.c.l.b16 %v545
        %v614 = vunpack.c.l.b16 %v546
        %v615 = vunpack.c.l.b16 %v547
        %v616 = vunpack.c.l.b16 %v548
        %v617 = vunpack.c.l.b16 %v549
        %v618 = vunpack.c.l.b16 %v550
        %v619 = vunpack.c.l.b16 %v551
        %v620 = vunpack.c.l.b16 %v552
        %v621 = vunpack.c.l.b16 %v553
        %v622 = vunpack.c.l.b16 %v554
        %v623 = vunpack.c.l.b16 %v555
        %v624 = vunpack.c.l.b16 %v556
        %v625 = vunpack.c.l.b16 %v557
        %v626 = vunpack.c.l.b16 %v558
        %v627 = vunpack.c.l.b16 %v559
        %v628 = vunpack.c.l.b16 %v560
        %v629 = vunpack.c.l.b16 %v561
        %v630 = vunpack.c.l.b16 %v562
        %v631 = vunpack.c.l.b16 %v563
        %v632 = vunpack.c.l.b16 %v564
        %v633 = vunpack.c.l.b16 %v565
        %v634 = vunpack.c.l.b16 %v566
        %v635 = vunpack.c.l.b16 %v567
        %v636 = vunpack.c.l.b16 %v568
        %v637 = vunpack.c.l.b16 %v569
        %v638 = vpack.c.b16 %v607, %v606
        %v639 = vpack.c.b16 %v609, %v608
        %v640 = vpack.c.b16 %v611, %v610
        %v641 = vpack.c.b16 %v613, %v612
        %v642 = vpack.c.b16 %v615, %v614
        %v643 = vpack.c.b16 %v617, %v616
        %v644 = vpack.c.b16 %v619, %v618
        %v645 = vpack.c.b16 %v621, %v620
        %v646 = vpack.c.b16 %v623, %v622
        %v647 = vpack.c.b16 %v625, %v624
        %v648 = vpack.c.b16 %v627, %v626
        %v649 = vpack.c.b16 %v629, %v628
        %v650 = vpack.c.b16 %v631, %v630
        %v651 = vpack.c.b16 %v633, %v632
        %v652 = vpack.c.b16 %v635, %v634
        %v653 = vpack.c.b16 %v637, %v636
        %670 = vmatpush.bf16.msra.mxu0 %v645
        %671 = vmatpush.bf16.msra.mxu0 %v644
        %672 = vmatpush.bf16.msra.mxu0 %v643
        %673 = vmatpush.bf16.msra.mxu0 %v642
        %674 = vmatpush.bf16.msra.mxu0 %v641
        %675 = vmatpush.bf16.msra.mxu0 %v640
        %676 = vmatpush.bf16.msra.mxu0 %v639
        %677 = vmatpush.bf16.msra.mxu0 %v638
        %678 = vmatmul.bf16.gmra.mxu0 %v522
        %v679 = vpop.f32.mrf.mxu0
        %v680 = vadd.f32 %v572, %v679
        %v681 = vpop.f32.mrf.mxu0
        %v682 = vadd.f32 %v572, %v681
        %683 = vmatmul.bf16.gmra.mxu0 %v524
        %v684 = vpop.f32.mrf.mxu0
        %v685 = vadd.f32 %v572, %v684
        %v686 = vpop.f32.mrf.mxu0
        %v687 = vadd.f32 %v572, %v686
        %688 = vmatmul.bf16.gmra.mxu0 %v526
        %v689 = vpop.f32.mrf.mxu0
        %v690 = vadd.f32 %v572, %v689
        %v691 = vpop.f32.mrf.mxu0
        %v692 = vadd.f32 %v572, %v691
        %693 = vmatmul.bf16.gmra.mxu0 %v528
        %v694 = vpop.f32.mrf.mxu0
        %v695 = vadd.f32 %v572, %v694
        %v696 = vpop.f32.mrf.mxu0
        %v697 = vadd.f32 %v572, %v696
        %698 = vmatmul.bf16.gmra.mxu0 %v530
        %v699 = vpop.f32.mrf.mxu0
        %v700 = vadd.f32 %v572, %v699
        %v701 = vpop.f32.mrf.mxu0
        %v702 = vadd.f32 %v572, %v701
        %703 = vmatmul.bf16.gmra.mxu0 %v532
        %v704 = vpop.f32.mrf.mxu0
        %v705 = vadd.f32 %v572, %v704
        %v706 = vpop.f32.mrf.mxu0
        %v707 = vadd.f32 %v572, %v706
        %708 = vmatmul.bf16.gmra.mxu0 %v534
        %v709 = vpop.f32.mrf.mxu0
        %v710 = vadd.f32 %v572, %v709
        %v711 = vpop.f32.mrf.mxu0
        %v712 = vadd.f32 %v572, %v711
        %713 = vmatmul.bf16.gmra.mxu0 %v536
        %v714 = vpop.f32.mrf.mxu0
        %v715 = vadd.f32 %v572, %v714
        %v716 = vpop.f32.mrf.mxu0
        %v717 = vadd.f32 %v572, %v716
        %718 = vdwg.mxu0
        %719 = vmatpush.bf16.msra.mxu0 %v653
        %720 = vmatpush.bf16.msra.mxu0 %v652
        %721 = vmatpush.bf16.msra.mxu0 %v651
        %722 = vmatpush.bf16.msra.mxu0 %v650
        %723 = vmatpush.bf16.msra.mxu0 %v649
        %724 = vmatpush.bf16.msra.mxu0 %v648
        %725 = vmatpush.bf16.msra.mxu0 %v647
        %726 = vmatpush.bf16.msra.mxu0 %v646
        %727 = vmatmul.bf16.gmra.mxu0 %v523
        %v728 = vpop.f32.mrf.mxu0
        %v729 = vadd.f32 %v680, %v728
        %v730 = vpop.f32.mrf.mxu0
        %v731 = vadd.f32 %v682, %v730
        %732 = vmatmul.bf16.gmra.mxu0 %v525
        %v733 = vpop.f32.mrf.mxu0
        %v734 = vadd.f32 %v685, %v733
        %v735 = vpop.f32.mrf.mxu0
        %v736 = vadd.f32 %v687, %v735
        %737 = vmatmul.bf16.gmra.mxu0 %v527
        %v738 = vpop.f32.mrf.mxu0
        %v739 = vadd.f32 %v690, %v738
        %v740 = vpop.f32.mrf.mxu0
        %v741 = vadd.f32 %v692, %v740
        %742 = vmatmul.bf16.gmra.mxu0 %v529
        %v743 = vpop.f32.mrf.mxu0
        %v744 = vadd.f32 %v695, %v743
        %v745 = vpop.f32.mrf.mxu0
        %v746 = vadd.f32 %v697, %v745
        %747 = vmatmul.bf16.gmra.mxu0 %v531
        %v748 = vpop.f32.mrf.mxu0
        %v749 = vadd.f32 %v700, %v748
        %v750 = vpop.f32.mrf.mxu0
        %v751 = vadd.f32 %v702, %v750
        %752 = vmatmul.bf16.gmra.mxu0 %v533
        %v753 = vpop.f32.mrf.mxu0
        %v754 = vadd.f32 %v705, %v753
        %v755 = vpop.f32.mrf.mxu0
        %v756 = vadd.f32 %v707, %v755
        %757 = vmatmul.bf16.gmra.mxu0 %v535
        %v758 = vpop.f32.mrf.mxu0
        %v759 = vadd.f32 %v710, %v758
        %v760 = vpop.f32.mrf.mxu0
        %v761 = vadd.f32 %v712, %v760
        %762 = vmatmul.bf16.gmra.mxu0 %v537
        %v763 = vpop.f32.mrf.mxu0
        %v764 = vadd.f32 %v715, %v763
        %v765 = vpop.f32.mrf.mxu0
        %v766 = vadd.f32 %v717, %v765
        %767 = vdwg.mxu0
        %v768 = vmax.f32 %v729, 0.0
        %v769 = vmax.f32 %v731, 0.0
        %v770 = vmax.f32 %v734, 0.0
        %v771 = vmax.f32 %v736, 0.0
        %v772 = vmax.f32 %v739, 0.0
        %v773 = vmax.f32 %v741, 0.0
        %v774 = vmax.f32 %v744, 0.0
        %v775 = vmax.f32 %v746, 0.0
        %v776 = vmax.f32 %v749, 0.0
        %v777 = vmax.f32 %v751, 0.0
        %v778 = vmax.f32 %v754, 0.0
        %v779 = vmax.f32 %v756, 0.0
        %v780 = vmax.f32 %v759, 0.0
        %v781 = vmax.f32 %v761, 0.0
        %v782 = vmax.f32 %v764, 0.0
        %v783 = vmax.f32 %v766, 0.0
        %784 = vst [vmem:[%s218] sm:$0xff] %v768
        %785 = vst [vmem:[%s218 + $0x8] sm:$0xff] %v769
        %786 = vst [vmem:[%s218 + $0x10] sm:$0xff] %v770
        %787 = vst [vmem:[%s218 + $0x18] sm:$0xff] %v771
        %788 = vst [vmem:[%s218 + $0x20] sm:$0xff] %v772
        %789 = vst [vmem:[%s218 + $0x28] sm:$0xff] %v773
        %790 = vst [vmem:[%s218 + $0x30] sm:$0xff] %v774
        %791 = vst [vmem:[%s218 + $0x38] sm:$0xff] %v775
        %792 = vst [vmem:[%s218 + $0x40] sm:$0xff] %v776
        %793 = vst [vmem:[%s218 + $0x48] sm:$0xff] %v777
        %794 = vst [vmem:[%s218 + $0x50] sm:$0xff] %v778
        %795 = vst [vmem:[%s218 + $0x58] sm:$0xff] %v779
        %796 = vst [vmem:[%s218 + $0x60] sm:$0xff] %v780
        %797 = vst [vmem:[%s218 + $0x68] sm:$0xff] %v781
        %798 = vst [vmem:[%s218 + $0x70] sm:$0xff] %v782
        %799 = vst [vmem:[%s218 + $0x78] sm:$0xff] %v783
        %s800 = sand.u32 %s137, 1
        %s801 = scalar_lea.sflag [#allocation3], %s800
        %s802 = sand.u32 %s137, 1
        %s803 = smul.addr %s802, 128
        %s804 = scalar_lea.vmem [#allocation2], %s803
        // Predicated region
        $region41: #{dense_arch_forward.1} parent=39 // pred_check
          %p805 = pneg %p147
        $region42: #{dense_arch_forward.1} parent=39 // pred_check_branch
          %807 = sbr.rel (%p805) target = $region44
        $region43: #{dense_arch_forward.1} parent=39 // pred_region
          %s808 = smul.u32 16, %s19
          %810 = vsyncadd %s801, 0
          %s811 = smul.addr %s808, 8
          %s812 = scalar_lea.hbm %s5, %s811
          %s813 = sshll.u32 %s804, 4
          %s814 = int_to_ptr.vmem [resolvable:$true] %s813
          %s815 = sshll.u32 %s812, 4
          %s816 = int_to_ptr.hbm [resolvable:$true] %s815
          %821 = dma.vmem_to_hbm [thread:$0]  %s814, 2048, %s816, %s801, 128, 128, 8
        $region44: #{dense_arch_forward.1} parent=39 // pred_fallthru
          _
      $region40: #{dense_arch_forward.1} parent=5 // pred_fallthru
        _
      %p822 = scmp.le.s32.totalorder 2, %s14
      // Predicated region
      $region45: #{dense_arch_forward.1} parent=5 // pred_check
        %p823 = pneg %p822
      $region46: #{dense_arch_forward.1} parent=5 // pred_check_branch
        %825 = sbr.rel (%p823) target = $region48
      $region47: #{dense_arch_forward.1} parent=5 // pred_region
        %s826 = ssub.s32 %s14, 2
        // Predicated region
        $region49: #{dense_arch_forward.1} parent=47 // pred_check
          %p827 = pneg %p153
        $region50: #{dense_arch_forward.1} parent=47 // pred_check_branch
          %829 = sbr.rel (%p827) target = $region52
        $region51: #{dense_arch_forward.1} parent=47 // pred_region
          %s830 = sand.u32 %s138, 1
          %s831 = scalar_lea.sflag [#allocation3], %s830
          %s832 = sand.u32 %s138, 1
          %s833 = smul.addr %s832, 128
          %s834 = scalar_lea.vmem [#allocation2], %s833
          %836 = dma.done %s831, 2048
        $region52: #{dense_arch_forward.1} parent=47 // pred_fallthru
          _
      $region48: #{dense_arch_forward.1} parent=5 // pred_fallthru
        _
    $region6: #{dense_arch_forward.1} parent=1 // loop_footer
      %s18 = sadd.s32 1, %s14
    $region7: #{dense_arch_forward.1} parent=1 // loop_footer_branch
      %13 = sbr.rel target = $region3
    $region8: #{dense_arch_forward.1} parent=1 // loop_exit
      _
    %837 = vsyncpa [#allocation3], 1
    %s838 = scalar_lea.sflag [#allocation3], 1
    %839 = vsyncpa %s838, 1

</llo_original>
